<compile_context>
chip_gen: v7x
topology: tpu7x:2x2x1
jax: 0.10.0
libtpu: 0.0.40
codegen_flags: <defaults>
</compile_context>

<pallas_src>
import functools

import jax
import jax.numpy as jnp
from jax import lax
from jax.experimental import pallas as pl
from jax.experimental.pallas import tpu as pltpu


def _round_up(n: int, m: int) -> int:
    return ((n + m - 1) // m) * m


def mlp_kernel(x_ref, w1_ref, b1_ref, w2_ref, b2_ref, o_ref):
    # fc1: contract x (TB, In) with w1 (Hid, In) over the In axis -> (TB, Hid)
    h = lax.dot_general(
        x_ref[...], w1_ref[...],
        dimension_numbers=(((1,), (1,)), ((), ())),
        preferred_element_type=jnp.float32,
    )
    # Bias + ReLU on the f32 accumulator (free VPU work under the MXU).
    h = jnp.maximum(h + b1_ref[...], 0.0)
    # fc2: contract h (TB, Hid) with w2 (Out, Hid) over the Hid axis -> (TB, Out)
    out = lax.dot_general(
        h.astype(w2_ref.dtype), w2_ref[...],
        dimension_numbers=(((1,), (1,)), ((), ())),
        preferred_element_type=jnp.float32,
    )
    o_ref[...] = (out + b2_ref[...]).astype(o_ref.dtype)


@functools.partial(jax.jit, static_argnames=("compute_dtype", "batch_tile"))
def mlp_forward(x, w1, b1, w2, b2, *, compute_dtype=jnp.bfloat16, batch_tile=512):
    """x: (B, In); w1: (Hid, In); b1: (Hid,); w2: (Out, Hid); b2: (Out,).

    Returns (B, Out) float32, identical semantics to the PyTorch MLP forward.
    """
    B, In = x.shape
    Hid, _ = w1.shape
    Out, _ = w2.shape

    # Lane-dense padding of feature dims (multiples of 128); zero padding is
    # exact: padded In columns contract with zero weights, padded Hid units get
    # bias 0 -> ReLU 0 -> contribute 0, padded Out columns are sliced off.
    In_p = _round_up(In, 128)
    Hid_p = _round_up(Hid, 128)
    Out_p = _round_up(Out, 128)

    # Batch tile: biggest tile up to `batch_tile`, sublane-aligned (multiple of 8).
    TB = min(batch_tile, _round_up(B, 8))
    Bp = _round_up(B, TB)

    x_p = jnp.pad(x, ((0, Bp - B), (0, In_p - In))).astype(compute_dtype)
    w1_p = jnp.pad(w1, ((0, Hid_p - Hid), (0, In_p - In))).astype(compute_dtype)
    w2_p = jnp.pad(w2, ((0, Out_p - Out), (0, Hid_p - Hid))).astype(compute_dtype)
    b1_p = jnp.pad(b1, (0, Hid_p - Hid)).reshape(1, Hid_p).astype(jnp.float32)
    b2_p = jnp.pad(b2, (0, Out_p - Out)).reshape(1, Out_p).astype(jnp.float32)

    grid = (Bp // TB,)

    out_p = pl.pallas_call(
        mlp_kernel,
        out_shape=jax.ShapeDtypeStruct((Bp, Out_p), jnp.float32),
        grid=grid,
        in_specs=[
            # x tile: streamed over the batch grid axis (double-buffered).
            pl.BlockSpec((TB, In_p), lambda i: (i, 0)),
            # Weights / biases: constant block index -> VMEM-resident across tiles.
            pl.BlockSpec((Hid_p, In_p), lambda i: (0, 0)),
            pl.BlockSpec((1, Hid_p), lambda i: (0, 0)),
            pl.BlockSpec((Out_p, Hid_p), lambda i: (0, 0)),
            pl.BlockSpec((1, Out_p), lambda i: (0, 0)),
        ],
        out_specs=pl.BlockSpec((TB, Out_p), lambda i: (i, 0)),
        compiler_params=pltpu.CompilerParams(
            dimension_semantics=("parallel",),  # batch tiles independent (megacore on v7x)
        ),
    )(x_p, w1_p, b1_p, w2_p, b2_p)

    # TODO(synk): for very large Hid/In/Out, add a Hid-reduction grid axis and
    # fold b2 into the accumulator init so resident weights fit v7x's 64 MiB VMEM.
    return out_p[:B, :Out]


def init_linear(key, out_features, in_features, dtype=jnp.float32):
    """Deterministic init mimicking torch.nn.Linear default (uniform +/- 1/sqrt(fan_in))."""
    kw, kb = jax.random.split(key)
    bound = 1.0 / (in_features ** 0.5)
    w = jax.random.uniform(kw, (out_features, in_features), dtype,
                           minval=-bound, maxval=bound)
    b = jax.random.uniform(kb, (out_features,), dtype,
                           minval=-bound, maxval=bound)
    return w, b


if __name__ == "__main__":
    # MLP(input_size=32, hidden_size=64, output_size=16), batch=8
    batch, input_size, hidden_size, output_size = 8, 32, 64, 16

    key = jax.random.PRNGKey(0)
    kx, k1, k2 = jax.random.split(key, 3)

    x = jax.random.normal(kx, (batch, input_size), jnp.float32)
    w1, b1 = init_linear(k1, hidden_size, input_size)
    w2, b2 = init_linear(k2, output_size, hidden_size)

    # Plain-JAX reference (same semantics as the PyTorch module).
    ref = jnp.maximum(x @ w1.T + b1, 0.0) @ w2.T + b2

    # Exact-semantics check with f32 MXU operands.
    out_f32 = mlp_forward(x, w1, b1, w2, b2, compute_dtype=jnp.float32)
    out_f32 = jax.block_until_ready(out_f32)
    assert out_f32.shape == (batch, output_size)
    assert jnp.allclose(out_f32, ref, atol=1e-5, rtol=1e-5)

    # Fast path: bf16 operands, f32 accumulation (looser tolerance).
    out_bf16 = mlp_forward(x, w1, b1, w2, b2)  # compute_dtype=bf16 default
    out_bf16 = jax.block_until_ready(out_bf16)
    assert out_bf16.shape == (batch, output_size)
    assert jnp.allclose(out_bf16, ref, atol=5e-2, rtol=5e-2)

    print("KERNEL_OK")
</pallas_src>

<mosaic_0001>
module attributes {stable_mosaic.version = 11 : i64} {
  func.func @mlp_kernel(%arg0: i32, %arg1: memref<8x128xf32, #tpu.memory_space<vmem>>, %arg2: memref<128x128xf32, #tpu.memory_space<vmem>>, %arg3: memref<1x128xf32, #tpu.memory_space<vmem>>, %arg4: memref<128x128xf32, #tpu.memory_space<vmem>>, %arg5: memref<1x128xf32, #tpu.memory_space<vmem>>, %arg6: memref<8x128xf32, #tpu.memory_space<vmem>>) attributes {dimension_semantics = [#tpu.dimension_semantics<parallel>], iteration_bounds = array<i64: 1>, scalar_prefetch = 0 : i64, scratch_operands = 0 : i64, tpu.core_type = #tpu.core_type<tc>, window_params = [{transform_indices = @transform_0, window_bounds = array<i64: 8, 128>}, {pipeline_mode = #tpu.pipeline_mode<synchronous>, transform_indices = @transform_1, window_bounds = array<i64: 128, 128>}, {pipeline_mode = #tpu.pipeline_mode<synchronous>, transform_indices = @transform_2, window_bounds = array<i64: 1, 128>}, {pipeline_mode = #tpu.pipeline_mode<synchronous>, transform_indices = @transform_3, window_bounds = array<i64: 128, 128>}, {pipeline_mode = #tpu.pipeline_mode<synchronous>, transform_indices = @transform_4, window_bounds = array<i64: 1, 128>}, {transform_indices = @transform_5, window_bounds = array<i64: 8, 128>}]} {
    %c0 = arith.constant 0 : index
    %c0_0 = arith.constant 0 : index
    %0 = vector.load %arg1[%c0, %c0_0] : memref<8x128xf32, #tpu.memory_space<vmem>>, vector<8x128xf32>
    %c0_1 = arith.constant 0 : index
    %c0_2 = arith.constant 0 : index
    %1 = vector.load %arg2[%c0_1, %c0_2] : memref<128x128xf32, #tpu.memory_space<vmem>>, vector<128x128xf32>
    %cst = arith.constant dense<0.000000e+00> : vector<8x128xf32>
    %2 = tpu.matmul %0, %1, %cst {dimension_numbers = #tpu.dot_dimension_numbers<[1], [1], [0], [0], [0, 0, 1, 0], [], []>} : vector<8x128xf32>, vector<128x128xf32>, vector<8x128xf32> -> vector<8x128xf32>
    %c0_3 = arith.constant 0 : index
    %c0_4 = arith.constant 0 : index
    %3 = vector.load %arg3[%c0_3, %c0_4] : memref<1x128xf32, #tpu.memory_space<vmem>>, vector<1x128xf32>
    %4 = vector.broadcast %3 : vector<1x128xf32> to vector<8x128xf32>
    %5 = arith.addf %2, %4 : vector<8x128xf32>
    %cst_5 = arith.constant 0.000000e+00 : f32
    %6 = vector.broadcast %cst_5 : f32 to vector<8x128xf32>
    %7 = arith.maximumf %5, %6 : vector<8x128xf32>
    %c0_6 = arith.constant 0 : index
    %c0_7 = arith.constant 0 : index
    %8 = vector.load %arg4[%c0_6, %c0_7] : memref<128x128xf32, #tpu.memory_space<vmem>>, vector<128x128xf32>
    %cst_8 = arith.constant dense<0.000000e+00> : vector<8x128xf32>
    %9 = tpu.matmul %7, %8, %cst_8 {dimension_numbers = #tpu.dot_dimension_numbers<[1], [1], [0], [0], [0, 0, 1, 0], [], []>} : vector<8x128xf32>, vector<128x128xf32>, vector<8x128xf32> -> vector<8x128xf32>
    %c0_9 = arith.constant 0 : index
    %c0_10 = arith.constant 0 : index
    %10 = vector.load %arg5[%c0_9, %c0_10] : memref<1x128xf32, #tpu.memory_space<vmem>>, vector<1x128xf32>
    %11 = vector.broadcast %10 : vector<1x128xf32> to vector<8x128xf32>
    %12 = arith.addf %9, %11 : vector<8x128xf32>
    %c0_11 = arith.constant 0 : index
    %c0_12 = arith.constant 0 : index
    %13 = vector.load %arg6[%c0_11, %c0_12] : memref<8x128xf32, #tpu.memory_space<vmem>>, vector<8x128xf32>
    tpu.vector_store %arg6[%c0_11, %c0_12], %12 {strides = array<i32>} : memref<8x128xf32, #tpu.memory_space<vmem>>, vector<8x128xf32>,
    return
  }
  func.func @transform_0(%arg0: i32) -> (i32, i32) {
    %c0_i32 = arith.constant 0 : i32
    %c0_i32_0 = arith.constant 0 : i32
    return %arg0, %c0_i32 : i32, i32
  }
  func.func @transform_1(%arg0: i32) -> (i32, i32) {
    %c0_i32 = arith.constant 0 : i32
    %c0_i32_0 = arith.constant 0 : i32
    %c0_i32_1 = arith.constant 0 : i32
    return %c0_i32, %c0_i32_0 : i32, i32
  }
  func.func @transform_2(%arg0: i32) -> (i32, i32) {
    %c0_i32 = arith.constant 0 : i32
    %c0_i32_0 = arith.constant 0 : i32
    %c0_i32_1 = arith.constant 0 : i32
    return %c0_i32, %c0_i32_0 : i32, i32
  }
  func.func @transform_3(%arg0: i32) -> (i32, i32) {
    %c0_i32 = arith.constant 0 : i32
    %c0_i32_0 = arith.constant 0 : i32
    %c0_i32_1 = arith.constant 0 : i32
    return %c0_i32, %c0_i32_0 : i32, i32
  }
  func.func @transform_4(%arg0: i32) -> (i32, i32) {
    %c0_i32 = arith.constant 0 : i32
    %c0_i32_0 = arith.constant 0 : i32
    %c0_i32_1 = arith.constant 0 : i32
    return %c0_i32, %c0_i32_0 : i32, i32
  }
  func.func @transform_5(%arg0: i32) -> (i32, i32) {
    %c0_i32 = arith.constant 0 : i32
    %c0_i32_0 = arith.constant 0 : i32
    return %arg0, %c0_i32 : i32, i32
  }
}

</mosaic_0001>

<llo_original>
// kernel: mlp_forward.1
$region0: #{mlp_forward.1}
  #allocation0 [shape = 'u32[]', space=smem, size = 0x4, offset = 0x4, fixed_abs, tag = 'smem constant byte address 0x4 - core index']
  #allocation1 [shape = 'u32[144,128]{1,0:T(1,128)}', space=vmem, size = 0x12000, scoped, tag = 'internal scratch']
  %s0 = inlined_call_operand.vmem [shape: f32[8,128], index: 0, kind: input, shape index: {}]
  %s1 = inlined_call_operand.vmem [shape: f32[128,128], index: 1, kind: input, shape index: {}]
  %s2 = inlined_call_operand.vmem [shape: f32[1,128], index: 2, kind: input, shape index: {}]
  %s3 = inlined_call_operand.vmem [shape: f32[128,128], index: 3, kind: input, shape index: {}]
  %s4 = inlined_call_operand.vmem [shape: f32[1,128], index: 4, kind: input, shape index: {}]
  %s5 = inlined_call_operand.hbm [shape: f32[8,128], index: 5, kind: output, shape index: {}]
  %s6 = sld [smem:[#allocation0]]
  $region30: #{mlp_forward.1} parent=0
    _
  %s8 = ssub.s32 1, %s6
  %s9 = scalar_select 0, %s8, %s6
  $region1: #{mlp_forward.1} parent=0
    #allocation2 [shape = 'u8[4096]{0}', space=vmem, size = 0x1000, scoped, tag = 'output window, operand 0, single buffered']
    #allocation3 [shape = 's32[1]{0}', space=sflag, size = 0x4, scoped, tag = 'scoped memory for mlp_forward.1']
    %10 = vsyncpa [#allocation3], 0
    // Predicated region
    $region2: #{mlp_forward.1} parent=1 // pred_check
      _
    $region3: #{mlp_forward.1} parent=1 // pred_check_branch
      %12 = sbr.rel (0) target = $region5
    $region4: #{mlp_forward.1} parent=1 // pred_region
      _
    $region5: #{mlp_forward.1} parent=1 // pred_fallthru
      _
    // Predicated region
    $region6: #{mlp_forward.1} parent=1 // pred_check
      _
    $region7: #{mlp_forward.1} parent=1 // pred_check_branch
      %14 = sbr.rel (0) target = $region9
    $region8: #{mlp_forward.1} parent=1 // pred_region
      _
    $region9: #{mlp_forward.1} parent=1 // pred_fallthru
      _
    // Predicated region
    $region10: #{mlp_forward.1} parent=1 // pred_check
      _
    $region11: #{mlp_forward.1} parent=1 // pred_check_branch
      %16 = sbr.rel (0) target = $region13
    $region12: #{mlp_forward.1} parent=1 // pred_region
      _
    $region13: #{mlp_forward.1} parent=1 // pred_fallthru
      _
    // Predicated region
    $region14: #{mlp_forward.1} parent=1 // pred_check
      _
    $region15: #{mlp_forward.1} parent=1 // pred_check_branch
      %18 = sbr.rel (0) target = $region17
    $region16: #{mlp_forward.1} parent=1 // pred_region
      _
    $region17: #{mlp_forward.1} parent=1 // pred_fallthru
      _
    // Predicated region
    $region18: #{mlp_forward.1} parent=1 // pred_check
      _
    $region19: #{mlp_forward.1} parent=1 // pred_check_branch
      %20 = sbr.rel (0) target = $region21
    $region20: #{mlp_forward.1} parent=1 // pred_region
      _
    $region21: #{mlp_forward.1} parent=1 // pred_fallthru
      _
    %v21 = vld [vmem:[%s0] sm:$0xff]
    %v22 = vld [vmem:[%s1] sm:$0xff]
    %v23 = vld [vmem:[%s1 + $0x8] sm:$0xff]
    %v24 = vld [vmem:[%s1 + $0x10] sm:$0xff]
    %v25 = vld [vmem:[%s1 + $0x18] sm:$0xff]
    %v26 = vld [vmem:[%s1 + $0x20] sm:$0xff]
    %v27 = vld [vmem:[%s1 + $0x28] sm:$0xff]
    %v28 = vld [vmem:[%s1 + $0x30] sm:$0xff]
    %v29 = vld [vmem:[%s1 + $0x38] sm:$0xff]
    %v30 = vld [vmem:[%s1 + $0x40] sm:$0xff]
    %v31 = vld [vmem:[%s1 + $0x48] sm:$0xff]
    %v32 = vld [vmem:[%s1 + $0x50] sm:$0xff]
    %v33 = vld [vmem:[%s1 + $0x58] sm:$0xff]
    %v34 = vld [vmem:[%s1 + $0x60] sm:$0xff]
    %v35 = vld [vmem:[%s1 + $0x68] sm:$0xff]
    %v36 = vld [vmem:[%s1 + $0x70] sm:$0xff]
    %v37 = vld [vmem:[%s1 + $0x78] sm:$0xff]
    %v38 = vld [vmem:[%s2] sm:$0x1]
    %v40 = vlaneseq
    %v41 = vshrl.u32 %v40, 7
    %v42 = vsub.s32 0, %v41
    %v43 = vrot.slane %v38, %v42
    %45 = vmatprep.subr.mxu0 0.0
    %46 = vmatpush1.xpose.msra.mxu0 %v22
    %47 = vmatprep.subr.mxu0 0.0
    %48 = vmatpush1.xpose.msra.mxu0 %v23
    %49 = vmatprep.subr.mxu0 0.0
    %50 = vmatpush1.xpose.msra.mxu0 %v24
    %51 = vmatprep.subr.mxu0 0.0
    %52 = vmatpush1.xpose.msra.mxu0 %v25
    %53 = vmatprep.subr.mxu0 0.0
    %54 = vmatpush1.xpose.msra.mxu0 %v26
    %55 = vmatprep.subr.mxu0 0.0
    %56 = vmatpush1.xpose.msra.mxu0 %v27
    %57 = vmatprep.subr.mxu0 0.0
    %58 = vmatpush1.xpose.msra.mxu0 %v28
    %59 = vmatprep.subr.mxu0 0.0
    %60 = vmatpush1.xpose.msra.mxu0 %v29
    %61 = vmatprep.subr.mxu0 0.0
    %62 = vmatpush1.xpose.msra.mxu0 %v30
    %63 = vmatprep.subr.mxu0 0.0
    %64 = vmatpush1.xpose.msra.mxu0 %v31
    %65 = vmatprep.subr.mxu0 0.0
    %66 = vmatpush1.xpose.msra.mxu0 %v32
    %67 = vmatprep.subr.mxu0 0.0
    %68 = vmatpush1.xpose.msra.mxu0 %v33
    %69 = vmatprep.subr.mxu0 0.0
    %70 = vmatpush1.xpose.msra.mxu0 %v34
    %71 = vmatprep.subr.mxu0 0.0
    %72 = vmatpush1.xpose.msra.mxu0 %v35
    %73 = vmatprep.subr.mxu0 0.0
    %74 = vmatpush1.xpose.msra.mxu0 %v36
    %75 = vmatprep.subr.mxu0 0.0
    %76 = vmatpush1.xpose.msra.mxu0 %v37
    %77 = vmatprep.subr.mxu0 0.0
    %78 = vmatpush1.xpose.msra.mxu0 0.0
    %79 = vmatprep.subr.mxu0 0.0
    %80 = vmatpush1.xpose.msra.mxu0 0.0
    %81 = vmatprep.subr.mxu0 0.0
    %82 = vmatpush1.xpose.msra.mxu0 0.0
    %83 = vmatprep.subr.mxu0 0.0
    %84 = vmatpush1.xpose.msra.mxu0 0.0
    %85 = vmatprep.subr.mxu0 0.0
    %86 = vmatpush1.xpose.msra.mxu0 0.0
    %87 = vmatprep.subr.mxu0 0.0
    %88 = vmatpush1.xpose.msra.mxu0 0.0
    %89 = vmatprep.subr.mxu0 0.0
    %90 = vmatpush1.xpose.msra.mxu0 0.0
    %91 = vmatprep.subr.mxu0 0.0
    %92 = vmatpush1.xpose.msra.mxu0 0.0
    %93 = vmatprep.subr.mxu0 0.0
    %94 = vmatpush1.xpose.msra.mxu0 0.0
    %95 = vmatprep.subr.mxu0 0.0
    %96 = vmatpush1.xpose.msra.mxu0 0.0
    %97 = vmatprep.subr.mxu0 0.0
    %98 = vmatpush1.xpose.msra.mxu0 0.0
    %99 = vmatprep.subr.mxu0 0.0
    %100 = vmatpush1.xpose.msra.mxu0 0.0
    %101 = vmatprep.subr.mxu0 0.0
    %102 = vmatpush1.xpose.msra.mxu0 0.0
    %103 = vmatprep.subr.mxu0 0.0
    %104 = vmatpush1.xpose.msra.mxu0 0.0
    %105 = vmatprep.subr.mxu0 0.0
    %106 = vmatpush1.xpose.msra.mxu0 0.0
    %107 = vmatprep.subr.mxu0 0.0
    %108 = vmatpush1.xpose.msra.mxu0 0.0
    %109 = vmatprep.mubr.f32.mxu0 0.0
    %110 = vmatmul.mubr.f32.gmra.mrb[0].mxu0 %v21
    %v111 = vpop.f32.mrb[0].mxu0
    %v112 = vadd.f32 %v43, %v111
    %v113 = vpop.f32.mrb[0].mxu0
    %114 = vdwg.mxu0
    %v115 = vmax.f32 %v112, 0.0
    %v116 = vld [vmem:[%s3] sm:$0xff]
    %v117 = vld [vmem:[%s3 + $0x8] sm:$0xff]
    %v118 = vld [vmem:[%s3 + $0x10] sm:$0xff]
    %v119 = vld [vmem:[%s3 + $0x18] sm:$0xff]
    %v120 = vld [vmem:[%s3 + $0x20] sm:$0xff]
    %v121 = vld [vmem:[%s3 + $0x28] sm:$0xff]
    %v122 = vld [vmem:[%s3 + $0x30] sm:$0xff]
    %v123 = vld [vmem:[%s3 + $0x38] sm:$0xff]
    %v124 = vld [vmem:[%s3 + $0x40] sm:$0xff]
    %v125 = vld [vmem:[%s3 + $0x48] sm:$0xff]
    %v126 = vld [vmem:[%s3 + $0x50] sm:$0xff]
    %v127 = vld [vmem:[%s3 + $0x58] sm:$0xff]
    %v128 = vld [vmem:[%s3 + $0x60] sm:$0xff]
    %v129 = vld [vmem:[%s3 + $0x68] sm:$0xff]
    %v130 = vld [vmem:[%s3 + $0x70] sm:$0xff]
    %v131 = vld [vmem:[%s3 + $0x78] sm:$0xff]
    %v132 = vld [vmem:[%s4] sm:$0x1]
    %v134 = vlaneseq
    %v135 = vshrl.u32 %v134, 7
    %v136 = vsub.s32 0, %v135
    %v137 = vrot.slane %v132, %v136
    %139 = vmatprep.subr.mxu0 0.0
    %140 = vmatpush1.xpose.msra.mxu0 %v116
    %141 = vmatprep.subr.mxu0 0.0
    %142 = vmatpush1.xpose.msra.mxu0 %v117
    %143 = vmatprep.subr.mxu0 0.0
    %144 = vmatpush1.xpose.msra.mxu0 %v118
    %145 = vmatprep.subr.mxu0 0.0
    %146 = vmatpush1.xpose.msra.mxu0 %v119
    %147 = vmatprep.subr.mxu0 0.0
    %148 = vmatpush1.xpose.msra.mxu0 %v120
    %149 = vmatprep.subr.mxu0 0.0
    %150 = vmatpush1.xpose.msra.mxu0 %v121
    %151 = vmatprep.subr.mxu0 0.0
    %152 = vmatpush1.xpose.msra.mxu0 %v122
    %153 = vmatprep.subr.mxu0 0.0
    %154 = vmatpush1.xpose.msra.mxu0 %v123
    %155 = vmatprep.subr.mxu0 0.0
    %156 = vmatpush1.xpose.msra.mxu0 %v124
    %157 = vmatprep.subr.mxu0 0.0
    %158 = vmatpush1.xpose.msra.mxu0 %v125
    %159 = vmatprep.subr.mxu0 0.0
    %160 = vmatpush1.xpose.msra.mxu0 %v126
    %161 = vmatprep.subr.mxu0 0.0
    %162 = vmatpush1.xpose.msra.mxu0 %v127
    %163 = vmatprep.subr.mxu0 0.0
    %164 = vmatpush1.xpose.msra.mxu0 %v128
    %165 = vmatprep.subr.mxu0 0.0
    %166 = vmatpush1.xpose.msra.mxu0 %v129
    %167 = vmatprep.subr.mxu0 0.0
    %168 = vmatpush1.xpose.msra.mxu0 %v130
    %169 = vmatprep.subr.mxu0 0.0
    %170 = vmatpush1.xpose.msra.mxu0 %v131
    %171 = vmatprep.subr.mxu0 0.0
    %172 = vmatpush1.xpose.msra.mxu0 0.0
    %173 = vmatprep.subr.mxu0 0.0
    %174 = vmatpush1.xpose.msra.mxu0 0.0
    %175 = vmatprep.subr.mxu0 0.0
    %176 = vmatpush1.xpose.msra.mxu0 0.0
    %177 = vmatprep.subr.mxu0 0.0
    %178 = vmatpush1.xpose.msra.mxu0 0.0
    %179 = vmatprep.subr.mxu0 0.0
    %180 = vmatpush1.xpose.msra.mxu0 0.0
    %181 = vmatprep.subr.mxu0 0.0
    %182 = vmatpush1.xpose.msra.mxu0 0.0
    %183 = vmatprep.subr.mxu0 0.0
    %184 = vmatpush1.xpose.msra.mxu0 0.0
    %185 = vmatprep.subr.mxu0 0.0
    %186 = vmatpush1.xpose.msra.mxu0 0.0
    %187 = vmatprep.subr.mxu0 0.0
    %188 = vmatpush1.xpose.msra.mxu0 0.0
    %189 = vmatprep.subr.mxu0 0.0
    %190 = vmatpush1.xpose.msra.mxu0 0.0
    %191 = vmatprep.subr.mxu0 0.0
    %192 = vmatpush1.xpose.msra.mxu0 0.0
    %193 = vmatprep.subr.mxu0 0.0
    %194 = vmatpush1.xpose.msra.mxu0 0.0
    %195 = vmatprep.subr.mxu0 0.0
    %196 = vmatpush1.xpose.msra.mxu0 0.0
    %197 = vmatprep.subr.mxu0 0.0
    %198 = vmatpush1.xpose.msra.mxu0 0.0
    %199 = vmatprep.subr.mxu0 0.0
    %200 = vmatpush1.xpose.msra.mxu0 0.0
    %201 = vmatprep.subr.mxu0 0.0
    %202 = vmatpush1.xpose.msra.mxu0 0.0
    %203 = vmatprep.mubr.f32.mxu0 0.0
    %204 = vmatmul.mubr.f32.gmra.mrb[0].mxu0 %v115
    %v205 = vpop.f32.mrb[0].mxu0
    %v206 = vadd.f32 %v137, %v205
    %v207 = vpop.f32.mrb[0].mxu0
    %208 = vdwg.mxu0
    %209 = vst [vmem:[#allocation2] sm:$0xff] %v206
    // Predicated region
    $region22: #{mlp_forward.1} parent=1 // pred_check
      _
    $region23: #{mlp_forward.1} parent=1 // pred_check_branch
      %211 = sbr.rel (0) target = $region25
    $region24: #{mlp_forward.1} parent=1 // pred_region
      %s213 = ssub.s32 128, 128
      %214 = vsyncadd [#allocation3], %s213
      %s216 = sshll.u32 [#allocation2], 4
      %s217 = int_to_ptr.vmem [resolvable:$true] %s216
      %219 = dma.vmem_to_hbm [thread:$0]  %s217, 128, %s5, [#allocation3]
    $region25: #{mlp_forward.1} parent=1 // pred_fallthru
      _
    // Predicated region
    $region26: #{mlp_forward.1} parent=1 // pred_check
      _
    $region27: #{mlp_forward.1} parent=1 // pred_check_branch
      %221 = sbr.rel (0) target = $region29
    $region28: #{mlp_forward.1} parent=1 // pred_region
      %222 = dma.done [#allocation3], 128
    $region29: #{mlp_forward.1} parent=1 // pred_fallthru
      _
    %223 = vsyncpa [#allocation3], 1

</llo_original>
